<compile_context>
chip_gen: v7x
topology: tpu7x:2x2x1
jax: 0.10.0
libtpu: 0.0.40
codegen_flags: <defaults>
</compile_context>

<pallas_src>
import jax
import jax.numpy as jnp
from jax.experimental import pallas as pl
from jax.experimental.pallas import tpu as pltpu


def _make_se_kernel(inv_hw: float):
    """SE kernel for a block of shape (nb, C, HW)."""

    def kernel(x_ref, w1t_ref, b1_ref, w2t_ref, b2_ref, o_ref):
        # x block: (nb, C, HW) in the input dtype (no f32 copy of the slab).
        x = x_ref[...]

        # ---- Squeeze: global mean over the spatial/lane axis ----------------
        # Block covers the full HW extent, so the sum has no padded lanes.
        pooled = jnp.sum(x, axis=-1, dtype=jnp.float32) * inv_hw     # (nb, C)

        w1t = w1t_ref[...].astype(jnp.float32)    # (C, R)  == w1.T
        b1 = b1_ref[...].astype(jnp.float32)      # (1, R)
        w2t = w2t_ref[...].astype(jnp.float32)    # (R, C)  == w2.T
        b2 = b2_ref[...].astype(jnp.float32)      # (1, C)

        # ---- Excite: two tiny FCs, vectorized across the nb batch fold ------
        # C*R is tiny for SE blocks, so stay on VPU/XLU/EUP (an MXU matmul
        # would pad its result tile to 128 lanes for almost no useful work).
        # h[b, r] = sum_c pooled[b, c] * w1t[c, r]
        h = jnp.sum(pooled[:, :, None] * w1t[None, :, :], axis=1) + b1   # (nb, R)
        h = h * jax.nn.sigmoid(h)                                        # SiLU
        # g[b, c] = sigmoid(sum_r h[b, r] * w2t[r, c] + b2[c])
        g = jax.nn.sigmoid(
            jnp.sum(h[:, :, None] * w2t[None, :, :], axis=1) + b2)       # (nb, C)

        # ---- Scale: broadcast the per-(batch, channel) gate over HW ---------
        o_ref[...] = x * g[:, :, None].astype(x.dtype)

    return kernel


def _vmem_capacity_bytes() -> int:
    """Generation-aware VMEM capacity (v7x: 64 MiB, v5e/v6e: 128 MiB)."""
    try:
        return int(pltpu.get_tpu_info().vmem_capacity_bytes)
    except Exception:
        pass
    try:
        kind = jax.devices()[0].device_kind.lower()
        if "v7" in kind:
            return 64 * 1024 * 1024
        return 128 * 1024 * 1024
    except Exception:
        return 64 * 1024 * 1024          # conservative fallback


def squeeze_excite(x, w1, b1, w2, b2):
    """x: (N, C, H, W);  w1: (R, C);  b1: (R,);  w2: (C, R);  b2: (C,)."""
    n, c, hh, ww = x.shape
    r = w1.shape[0]
    hw = hh * ww
    itemsize = jnp.dtype(x.dtype).itemsize

    # Free metadata reshape: no pad, no slice, no extra HBM passes.
    x3 = x.reshape(n, c, hw)

    # ---- Block / grid selection ---------------------------------------------
    # Target ~4 MiB per x block (roofline sweet spot is >= ~512-wide tiles;
    # past a few MiB bigger blocks buy nothing), and never collapse the grid:
    # keep at least min(N, MIN_STEPS) steps so input DMA and output writeback
    # overlap across steps and both v7x TensorCores get work.
    BLOCK_TARGET = 4 << 20
    MIN_STEPS = 4

    vmem_cap = _vmem_capacity_bytes()
    per_batch_bytes = c * hw * itemsize

    nb = 1
    for cand in range(1, n + 1):
        if n % cand != 0:
            continue
        steps = n // cand
        if steps < min(n, MIN_STEPS):
            continue
        if cand > 1 and cand * per_batch_bytes > BLOCK_TARGET:
            continue
        nb = max(nb, cand)
    # TODO(synk): add a two-pass HW-tiled fallback (pooled-sum accumulation
    # over an "arbitrary" HW grid axis + second multiply pass) for shapes where
    # even a single (C, HW) block exceeds the VMEM budget.

    grid = (n // nb,)

    # ---- VMEM limit (explicit; scoped default is 16/32 MiB) ------------------
    sub = 8 if itemsize >= 4 else (16 if itemsize == 2 else 32)
    c_pad = ((c + sub - 1) // sub) * sub
    hw_lane_pad = ((hw + 127) // 128) * 128
    block_bytes_padded = nb * c_pad * hw_lane_pad * itemsize
    weight_bytes = (2 * c * r + r + c) * 4 + (1 << 16)
    # double-buffered input block + double-buffered output block + weights
    needed = 4 * block_bytes_padded + weight_bytes
    vmem_limit = int(min(max(2 * needed, 32 << 20), vmem_cap - (16 << 20)))
    vmem_limit = max(vmem_limit, 16 << 20)

    # Weight layouts chosen so the in-kernel gate needs no transposes.
    w1t = w1.T                     # (C, R)
    b1_row = b1.reshape(1, r)      # (1, R)
    w2t = w2.T                     # (R, C)
    b2_row = b2.reshape(1, c)      # (1, C)

    kernel = _make_se_kernel(1.0 / float(hw))

    out3 = pl.pallas_call(
        kernel,
        out_shape=jax.ShapeDtypeStruct((n, c, hw), x.dtype),
        grid_spec=pltpu.PrefetchScalarGridSpec(
            num_scalar_prefetch=0,
            grid=grid,
            in_specs=[
                # Last two block dims equal the full (C, HW) extents -> valid
                # for any C / HW, no wrapper-side padding needed.
                pl.BlockSpec((nb, c, hw), lambda i: (i, 0, 0)),   # x batches
                pl.BlockSpec((c, r), lambda i: (0, 0)),           # w1.T
                pl.BlockSpec((1, r), lambda i: (0, 0)),           # b1
                pl.BlockSpec((r, c), lambda i: (0, 0)),           # w2.T
                pl.BlockSpec((1, c), lambda i: (0, 0)),           # b2
            ],
            out_specs=pl.BlockSpec((nb, c, hw), lambda i: (i, 0, 0)),
        ),
        compiler_params=pltpu.CompilerParams(
            dimension_semantics=("parallel",),
            vmem_limit_bytes=vmem_limit,
        ),
    )(x3, w1t, b1_row, w2t, b2_row)

    return out3.reshape(n, c, hh, ww)


def _reference(x, w1, b1, w2, b2):
    # Plain-JAX reference mirroring the PyTorch forward.
    pooled = jnp.mean(x.astype(jnp.float32), axis=(2, 3))            # (N, C)
    h = pooled @ w1.T + b1                                            # (N, R)
    h = h * jax.nn.sigmoid(h)                                         # SiLU
    g = jax.nn.sigmoid(h @ w2.T + b2)                                 # (N, C)
    return (x.astype(jnp.float32) * g[:, :, None, None]).astype(x.dtype)


if __name__ == "__main__":
    # Module config: in_ch=4, se_ratio=0.25 -> reduced_ch = max(1, int(4*0.25)) = 1
    N, C, H, W = 2, 4, 16, 16
    R = max(1, int(C * 0.25))

    key = jax.random.PRNGKey(0)
    kx, k1, kb1, k2, kb2 = jax.random.split(key, 5)

    x = jax.random.normal(kx, (N, C, H, W), dtype=jnp.float32)
    # Conv2d(in_ch -> reduced_ch, 1x1): weight (R, C, 1, 1) -> (R, C), bias (R,)
    w1 = jax.random.normal(k1, (R, C), dtype=jnp.float32) * 0.1
    b1 = jax.random.normal(kb1, (R,), dtype=jnp.float32) * 0.1
    # Conv2d(reduced_ch -> in_ch, 1x1): weight (C, R, 1, 1) -> (C, R), bias (C,)
    w2 = jax.random.normal(k2, (C, R), dtype=jnp.float32) * 0.1
    b2 = jax.random.normal(kb2, (C,), dtype=jnp.float32) * 0.1

    out = jax.jit(squeeze_excite)(x, w1, b1, w2, b2)
    out = jax.block_until_ready(out)

    ref = _reference(x, w1, b1, w2, b2)
    assert out.shape == (N, C, H, W)
    assert jnp.allclose(out, ref, atol=1e-5, rtol=1e-5), "mismatch vs reference"

    print("KERNEL_OK")
</pallas_src>

<mosaic_0001>
module attributes {stable_mosaic.version = 11 : i64} {
  func.func @kernel(%arg0: i32, %arg1: memref<1x4x256xf32, #tpu.memory_space<vmem>>, %arg2: memref<4x1xf32, #tpu.memory_space<vmem>>, %arg3: memref<1x1xf32, #tpu.memory_space<vmem>>, %arg4: memref<1x4xf32, #tpu.memory_space<vmem>>, %arg5: memref<1x4xf32, #tpu.memory_space<vmem>>, %arg6: memref<1x4x256xf32, #tpu.memory_space<vmem>>) attributes {dimension_semantics = [#tpu.dimension_semantics<parallel>], iteration_bounds = array<i64: 2>, scalar_prefetch = 0 : i64, scratch_operands = 0 : i64, tpu.core_type = #tpu.core_type<tc>, window_params = [{transform_indices = @transform_0, window_bounds = array<i64: 1, 4, 256>}, {pipeline_mode = #tpu.pipeline_mode<synchronous>, transform_indices = @transform_1, window_bounds = array<i64: 4, 1>}, {pipeline_mode = #tpu.pipeline_mode<synchronous>, transform_indices = @transform_2, window_bounds = array<i64: 1, 1>}, {pipeline_mode = #tpu.pipeline_mode<synchronous>, transform_indices = @transform_3, window_bounds = array<i64: 1, 4>}, {pipeline_mode = #tpu.pipeline_mode<synchronous>, transform_indices = @transform_4, window_bounds = array<i64: 1, 4>}, {transform_indices = @transform_5, window_bounds = array<i64: 1, 4, 256>}]} {
    %c0 = arith.constant 0 : index
    %c0_0 = arith.constant 0 : index
    %c0_1 = arith.constant 0 : index
    %0 = vector.load %arg1[%c0, %c0_0, %c0_1] : memref<1x4x256xf32, #tpu.memory_space<vmem>>, vector<1x4x256xf32>
    %cst = arith.constant dense<0.000000e+00> : vector<1x4xf32>
    %1 = vector.multi_reduction <add>, %0, %cst [2] : vector<1x4x256xf32> to vector<1x4xf32>
    %cst_2 = arith.constant 3.906250e-03 : f32
    %2 = vector.broadcast %cst_2 : f32 to vector<1x4xf32>
    %3 = arith.mulf %1, %2 : vector<1x4xf32>
    %c0_3 = arith.constant 0 : index
    %c0_4 = arith.constant 0 : index
    %4 = vector.load %arg2[%c0_3, %c0_4] : memref<4x1xf32, #tpu.memory_space<vmem>>, vector<4x1xf32>
    %c0_5 = arith.constant 0 : index
    %c0_6 = arith.constant 0 : index
    %5 = vector.load %arg3[%c0_5, %c0_6] : memref<1x1xf32, #tpu.memory_space<vmem>>, vector<1x1xf32>
    %c0_7 = arith.constant 0 : index
    %c0_8 = arith.constant 0 : index
    %6 = vector.load %arg4[%c0_7, %c0_8] : memref<1x4xf32, #tpu.memory_space<vmem>>, vector<1x4xf32>
    %c0_9 = arith.constant 0 : index
    %c0_10 = arith.constant 0 : index
    %7 = vector.load %arg5[%c0_9, %c0_10] : memref<1x4xf32, #tpu.memory_space<vmem>>, vector<1x4xf32>
    %8 = vector.shape_cast %3 : vector<1x4xf32> to vector<1x4x1xf32>
    %9 = vector.shape_cast %4 : vector<4x1xf32> to vector<1x4x1xf32>
    %10 = arith.mulf %8, %9 : vector<1x4x1xf32>
    %cst_11 = arith.constant dense<0.000000e+00> : vector<1x1xf32>
    %11 = vector.multi_reduction <add>, %10, %cst_11 [1] : vector<1x4x1xf32> to vector<1x1xf32>
    %12 = arith.addf %11, %5 : vector<1x1xf32>
    %13 = arith.negf %12 : vector<1x1xf32>
    %14 = math.exp %13 : vector<1x1xf32>
    %cst_12 = arith.constant 1.000000e+00 : f32
    %15 = vector.broadcast %cst_12 : f32 to vector<1x1xf32>
    %16 = arith.addf %15, %14 : vector<1x1xf32>
    %17 = arith.divf %15, %16 : vector<1x1xf32>
    %18 = arith.mulf %12, %17 : vector<1x1xf32>
    %19 = vector.shape_cast %18 : vector<1x1xf32> to vector<1x1x1xf32>
    %20 = vector.shape_cast %6 : vector<1x4xf32> to vector<1x1x4xf32>
    %21 = vector.broadcast %19 : vector<1x1x1xf32> to vector<1x1x4xf32>
    %22 = arith.mulf %21, %20 : vector<1x1x4xf32>
    %cst_13 = arith.constant dense<0.000000e+00> : vector<1x4xf32>
    %23 = vector.multi_reduction <add>, %22, %cst_13 [1] : vector<1x1x4xf32> to vector<1x4xf32>
    %24 = arith.addf %23, %7 : vector<1x4xf32>
    %25 = arith.negf %24 : vector<1x4xf32>
    %26 = math.exp %25 : vector<1x4xf32>
    %cst_14 = arith.constant 1.000000e+00 : f32
    %27 = vector.broadcast %cst_14 : f32 to vector<1x4xf32>
    %28 = arith.addf %27, %26 : vector<1x4xf32>
    %29 = arith.divf %27, %28 : vector<1x4xf32>
    %30 = vector.shape_cast %29 : vector<1x4xf32> to vector<1x4x1xf32>
    %31 = vector.broadcast %30 : vector<1x4x1xf32> to vector<1x4x256xf32>
    %32 = arith.mulf %0, %31 : vector<1x4x256xf32>
    %c0_15 = arith.constant 0 : index
    %c0_16 = arith.constant 0 : index
    %c0_17 = arith.constant 0 : index
    %33 = vector.load %arg6[%c0_15, %c0_16, %c0_17] : memref<1x4x256xf32, #tpu.memory_space<vmem>>, vector<1x4x256xf32>
    tpu.vector_store %arg6[%c0_15, %c0_16, %c0_17], %32 {strides = array<i32>} : memref<1x4x256xf32, #tpu.memory_space<vmem>>, vector<1x4x256xf32>,
    return
  }
  func.func @transform_0(%arg0: i32) -> (i32, i32, i32) {
    %c0_i32 = arith.constant 0 : i32
    %c0_i32_0 = arith.constant 0 : i32
    %c0_i32_1 = arith.constant 0 : i32
    return %arg0, %c0_i32, %c0_i32_0 : i32, i32, i32
  }
  func.func @transform_1(%arg0: i32) -> (i32, i32) {
    %c0_i32 = arith.constant 0 : i32
    %c0_i32_0 = arith.constant 0 : i32
    %c0_i32_1 = arith.constant 0 : i32
    return %c0_i32, %c0_i32_0 : i32, i32
  }
  func.func @transform_2(%arg0: i32) -> (i32, i32) {
    %c0_i32 = arith.constant 0 : i32
    %c0_i32_0 = arith.constant 0 : i32
    %c0_i32_1 = arith.constant 0 : i32
    return %c0_i32, %c0_i32_0 : i32, i32
  }
  func.func @transform_3(%arg0: i32) -> (i32, i32) {
    %c0_i32 = arith.constant 0 : i32
    %c0_i32_0 = arith.constant 0 : i32
    %c0_i32_1 = arith.constant 0 : i32
    return %c0_i32, %c0_i32_0 : i32, i32
  }
  func.func @transform_4(%arg0: i32) -> (i32, i32) {
    %c0_i32 = arith.constant 0 : i32
    %c0_i32_0 = arith.constant 0 : i32
    %c0_i32_1 = arith.constant 0 : i32
    return %c0_i32, %c0_i32_0 : i32, i32
  }
  func.func @transform_5(%arg0: i32) -> (i32, i32, i32) {
    %c0_i32 = arith.constant 0 : i32
    %c0_i32_0 = arith.constant 0 : i32
    %c0_i32_1 = arith.constant 0 : i32
    return %arg0, %c0_i32, %c0_i32_0 : i32, i32, i32
  }
}

</mosaic_0001>

<llo_original>
// kernel: squeeze_excite.1
$region0: #{squeeze_excite.1}
  #allocation0 [shape = 'u32[]', space=smem, size = 0x4, offset = 0x4, fixed_abs, tag = 'smem constant byte address 0x4 - core index']
  #allocation1 [shape = 'u32[144,128]{1,0:T(1,128)}', space=vmem, size = 0x12000, scoped, tag = 'internal scratch']
  #allocation2 [shape = 'f32[1,1]{1,0:T(1,128)S(1)}', space=vmem, size = 0x200, scoped, tag = 'scoped memory for squeeze_excite.1']
  %s0 = inlined_call_operand.vmem [shape: f32[2,4,256], index: 0, kind: input, shape index: {}]
  %s1 = inlined_call_operand.vmem [shape: f32[4,1], index: 1, kind: input, shape index: {}]
  %s2 = inlined_call_operand.<no memory space> [shape: f32[1,1], index: 2, kind: input, shape index: {}]
  %s3 = inlined_call_operand.vmem [shape: f32[1,4], index: 3, kind: input, shape index: {}]
  %s4 = inlined_call_operand.vmem [shape: f32[1,4], index: 4, kind: input, shape index: {}]
  %s5 = inlined_call_operand.vmem [shape: f32[2,4,256], index: 5, kind: output, shape index: {}]
  %s6 = sld [smem:[#allocation0]]
  $region53: #{squeeze_excite.1} parent=0
    _
  %s8 = ssub.s32 1, %s6
  %s9 = scalar_select 0, %s8, %s6
  %v10 = vstv %s2
  %11 = vst [vmem:[#allocation2] sm:$0x1] %v10
  loop: start=0, step=1, limit=4
  $region2: #{squeeze_excite.1} parent=0 // loop_pre_header
    _
  $region3: #{squeeze_excite.1} parent=0 // loop_header
    %s13 = sphi 0, %s17
    %p14 = scmp.ge.s32.totalorder %s13, 4
    %s23 = sphi 0, %s25
    %s26 = sphi 0, %s23
    %s27 = sphi 0, %s26
    %s43 = sphi 0, %s27
    %s47 = sphi 0, %s47
    %s49 = sphi 0, %s47
    %s50 = sphi 0, %s49
    %s64 = sphi 0, %s50
    %s68 = sphi 0, %s68
    %s70 = sphi 0, %s68
    %s71 = sphi 0, %s70
    %s85 = sphi 0, %s71
    %s89 = sphi 0, %s89
    %s91 = sphi 0, %s89
    %s92 = sphi 0, %s91
    %s106 = sphi 0, %s92
    %s110 = sphi 0, %s110
    %s112 = sphi 0, %s110
    %s113 = sphi 0, %s112
    %s127 = sphi 0, %s113
    %s133 = sphi 0, %s135
    %s136 = sphi 0, %s133
    %s137 = sphi 0, %s136
    %s153 = sphi 0, %s137
  $region4: #{squeeze_excite.1} parent=0 // loop_header_branch
    %16 = sbr.rel (%p14) target = $region8
  $region5: #{squeeze_excite.1} parent=0 // loop_body
    %s18 = ssub.s32 %s13, 1
    %s19 = ssub.s32 %s13, 2
    %s20 = sadd.s32 %s13, 1
    %s21 = ssub.s32 %s13, %s20
    %p22 = scmp.eq.s32.totalorder %s21, 0
    %s24 = sadd.s32 %s23, 1
    %s25 = scalar_select %p22, %s23, %s24
    %p28 = pneg %p22
    %p29 = scmp.eq.s32.totalorder %s13, 1
    %p30 = por %p28, %p29
    %p31 = scmp.ne.s32.totalorder %s23, %s26
    %p32 = scmp.eq.s32.totalorder %s13, 0
    %p33 = por %p31, %p32
    %p34 = scmp.ne.s32.totalorder %s23, %s26
    %p35 = scmp.eq.s32.totalorder %s18, 1
    %p36 = por %p34, %p35
    %p37 = scmp.ne.s32.totalorder %s26, %s27
    %p38 = scmp.eq.s32.totalorder %s18, 0
    %p39 = por %p37, %p38
    %p40 = scmp.ne.s32.totalorder %s26, %s27
    %p41 = scmp.eq.s32.totalorder %s19, 1
    %p42 = por %p40, %p41
    %p44 = scmp.ne.s32.totalorder %s27, %s43
    %p45 = scmp.eq.s32.totalorder %s19, 0
    %p46 = por %p44, %p45
    %s48 = sadd.s32 %s47, 1
    %p51 = scmp.eq.s32.totalorder %s13, 1
    %p52 = scmp.ne.s32.totalorder %s47, %s49
    %p53 = scmp.eq.s32.totalorder %s13, 0
    %p54 = por %p52, %p53
    %p55 = scmp.ne.s32.totalorder %s47, %s49
    %p56 = scmp.eq.s32.totalorder %s18, 1
    %p57 = por %p55, %p56
    %p58 = scmp.ne.s32.totalorder %s49, %s50
    %p59 = scmp.eq.s32.totalorder %s18, 0
    %p60 = por %p58, %p59
    %p61 = scmp.ne.s32.totalorder %s49, %s50
    %p62 = scmp.eq.s32.totalorder %s19, 1
    %p63 = por %p61, %p62
    %p65 = scmp.ne.s32.totalorder %s50, %s64
    %p66 = scmp.eq.s32.totalorder %s19, 0
    %p67 = por %p65, %p66
    %s69 = sadd.s32 %s68, 1
    %p72 = scmp.eq.s32.totalorder %s13, 1
    %p73 = scmp.ne.s32.totalorder %s68, %s70
    %p74 = scmp.eq.s32.totalorder %s13, 0
    %p75 = por %p73, %p74
    %p76 = scmp.ne.s32.totalorder %s68, %s70
    %p77 = scmp.eq.s32.totalorder %s18, 1
    %p78 = por %p76, %p77
    %p79 = scmp.ne.s32.totalorder %s70, %s71
    %p80 = scmp.eq.s32.totalorder %s18, 0
    %p81 = por %p79, %p80
    %p82 = scmp.ne.s32.totalorder %s70, %s71
    %p83 = scmp.eq.s32.totalorder %s19, 1
    %p84 = por %p82, %p83
    %p86 = scmp.ne.s32.totalorder %s71, %s85
    %p87 = scmp.eq.s32.totalorder %s19, 0
    %p88 = por %p86, %p87
    %s90 = sadd.s32 %s89, 1
    %p93 = scmp.eq.s32.totalorder %s13, 1
    %p94 = scmp.ne.s32.totalorder %s89, %s91
    %p95 = scmp.eq.s32.totalorder %s13, 0
    %p96 = por %p94, %p95
    %p97 = scmp.ne.s32.totalorder %s89, %s91
    %p98 = scmp.eq.s32.totalorder %s18, 1
    %p99 = por %p97, %p98
    %p100 = scmp.ne.s32.totalorder %s91, %s92
    %p101 = scmp.eq.s32.totalorder %s18, 0
    %p102 = por %p100, %p101
    %p103 = scmp.ne.s32.totalorder %s91, %s92
    %p104 = scmp.eq.s32.totalorder %s19, 1
    %p105 = por %p103, %p104
    %p107 = scmp.ne.s32.totalorder %s92, %s106
    %p108 = scmp.eq.s32.totalorder %s19, 0
    %p109 = por %p107, %p108
    %s111 = sadd.s32 %s110, 1
    %p114 = scmp.eq.s32.totalorder %s13, 1
    %p115 = scmp.ne.s32.totalorder %s110, %s112
    %p116 = scmp.eq.s32.totalorder %s13, 0
    %p117 = por %p115, %p116
    %p118 = scmp.ne.s32.totalorder %s110, %s112
    %p119 = scmp.eq.s32.totalorder %s18, 1
    %p120 = por %p118, %p119
    %p121 = scmp.ne.s32.totalorder %s112, %s113
    %p122 = scmp.eq.s32.totalorder %s18, 0
    %p123 = por %p121, %p122
    %p124 = scmp.ne.s32.totalorder %s112, %s113
    %p125 = scmp.eq.s32.totalorder %s19, 1
    %p126 = por %p124, %p125
    %p128 = scmp.ne.s32.totalorder %s113, %s127
    %p129 = scmp.eq.s32.totalorder %s19, 0
    %p130 = por %p128, %p129
    %s131 = ssub.s32 %s13, %s20
    %p132 = scmp.eq.s32.totalorder %s131, 0
    %s134 = sadd.s32 %s133, 1
    %s135 = scalar_select %p132, %s133, %s134
    %p138 = pneg %p132
    %p139 = scmp.eq.s32.totalorder %s13, 1
    %p140 = por %p138, %p139
    %p141 = scmp.ne.s32.totalorder %s133, %s136
    %p142 = scmp.eq.s32.totalorder %s13, 0
    %p143 = por %p141, %p142
    %p144 = scmp.ne.s32.totalorder %s133, %s136
    %p145 = scmp.eq.s32.totalorder %s18, 1
    %p146 = por %p144, %p145
    %p147 = scmp.ne.s32.totalorder %s136, %s137
    %p148 = scmp.eq.s32.totalorder %s18, 0
    %p149 = por %p147, %p148
    %p150 = scmp.ne.s32.totalorder %s136, %s137
    %p151 = scmp.eq.s32.totalorder %s19, 1
    %p152 = por %p150, %p151
    %p154 = scmp.ne.s32.totalorder %s137, %s153
    %p155 = scmp.eq.s32.totalorder %s19, 0
    %p156 = por %p154, %p155
    %p157 = scmp.le.s32.totalorder 1, %s13
    %p158 = scmp.lt.s32.totalorder %s13, 3
    %p159 = pnand %p157, %p158
    %p160 = pneg %p159
    // Predicated region
    $region9: #{squeeze_excite.1} parent=5 // pred_check
      _
    $region10: #{squeeze_excite.1} parent=5 // pred_check_branch
      %162 = sbr.rel (%p159) target = $region12
    $region11: #{squeeze_excite.1} parent=5 // pred_region
      %s163 = ssub.s32 %s13, 1
      // Predicated region
      $region13: #{squeeze_excite.1} parent=11 // pred_check
        %p164 = pneg %p60
      $region14: #{squeeze_excite.1} parent=11 // pred_check_branch
        %166 = sbr.rel (%p164) target = $region16
      $region15: #{squeeze_excite.1} parent=11 // pred_region
        _
      $region16: #{squeeze_excite.1} parent=11 // pred_fallthru
        _
      // Predicated region
      $region17: #{squeeze_excite.1} parent=11 // pred_check
        %p167 = pneg %p81
      $region18: #{squeeze_excite.1} parent=11 // pred_check_branch
        %169 = sbr.rel (%p167) target = $region20
      $region19: #{squeeze_excite.1} parent=11 // pred_region
        _
      $region20: #{squeeze_excite.1} parent=11 // pred_fallthru
        _
      // Predicated region
      $region21: #{squeeze_excite.1} parent=11 // pred_check
        %p170 = pneg %p102
      $region22: #{squeeze_excite.1} parent=11 // pred_check_branch
        %172 = sbr.rel (%p170) target = $region24
      $region23: #{squeeze_excite.1} parent=11 // pred_region
        _
      $region24: #{squeeze_excite.1} parent=11 // pred_fallthru
        _
      // Predicated region
      $region25: #{squeeze_excite.1} parent=11 // pred_check
        %p173 = pneg %p123
      $region26: #{squeeze_excite.1} parent=11 // pred_check_branch
        %175 = sbr.rel (%p173) target = $region28
      $region27: #{squeeze_excite.1} parent=11 // pred_region
        _
      $region28: #{squeeze_excite.1} parent=11 // pred_fallthru
        _
    $region12: #{squeeze_excite.1} parent=5 // pred_fallthru
      _
    %p176 = scmp.lt.s32.totalorder %s13, 2
    // Predicated region
    $region29: #{squeeze_excite.1} parent=5 // pred_check
      %p177 = pneg %p176
    $region30: #{squeeze_excite.1} parent=5 // pred_check_branch
      %179 = sbr.rel (%p177) target = $region32
    $region31: #{squeeze_excite.1} parent=5 // pred_region
      // Predicated region
      $region33: #{squeeze_excite.1} parent=31 // pred_check
        %p180 = pneg %p33
      $region34: #{squeeze_excite.1} parent=31 // pred_check_branch
        %182 = sbr.rel (%p180) target = $region36
      $region35: #{squeeze_excite.1} parent=31 // pred_region
        %p183 = scmp.lt.s32.totalorder %s13, 1
        %s184 = scalar_select %p183, %s13, 1
        %s185 = smul.addr %s184, 2
        %s186 = smul.addr %s185, 4
        %s187 = scalar_lea.vmem %s0, %s186
      $region36: #{squeeze_excite.1} parent=31 // pred_fallthru
        _
    $region32: #{squeeze_excite.1} parent=5 // pred_fallthru
      _
    %p188 = scmp.le.s32.totalorder 1, %s13
    %p189 = scmp.lt.s32.totalorder %s13, 3
    %p190 = pnand %p188, %p189
    %p191 = pneg %p190
    // Predicated region
    $region37: #{squeeze_excite.1} parent=5 // pred_check
      _
    $region38: #{squeeze_excite.1} parent=5 // pred_check_branch
      %193 = sbr.rel (%p190) target = $region40
    $region39: #{squeeze_excite.1} parent=5 // pred_region
      %s194 = ssub.s32 %s13, 1
      %p195 = scmp.lt.s32.totalorder %s18, 1
      %s196 = scalar_select %p195, %s18, 1
      %s197 = smul.addr %s196, 2
      %s198 = smul.addr %s197, 4
      %s199 = scalar_lea.vmem %s0, %s198
      %p200 = pneg %p39
      %p201 = pneg %p36
      %p202 = pneg %p60
      %p203 = pneg %p57
      %p204 = pneg %p81
      %p205 = pneg %p78
      %p206 = pneg %p102
      %p207 = pneg %p99
      %p208 = pneg %p123
      %p209 = pneg %p120
      %p210 = pneg %p149
      %p211 = pneg %p146
      %p212 = scmp.lt.s32.totalorder %s18, 1
      %s213 = scalar_select %p212, %s18, 1
      %s214 = smul.addr %s213, 2
      %s215 = smul.addr %s214, 4
      %s216 = scalar_lea.vmem %s5, %s215
      %p217 = scmp.lt.s32.totalorder %s18, 1
      %s218 = scalar_select %p217, %s18, 1
      %s219 = smul.addr %s218, 2
      %s220 = smul.addr %s219, 4
      %s221 = scalar_lea.vmem %s0, %s220
      %p222 = scmp.lt.s32.totalorder %s18, 1
      %s223 = scalar_select %p222, %s18, 1
      %s224 = smul.addr %s223, 2
      %s225 = smul.addr %s224, 4
      %s226 = scalar_lea.vmem %s5, %s225
      %v227 = vld [vmem:[%s221] sm:$0xff]
      %v229 = vcombine.high %v227, %v227
      %vm231 = vcmask 1043456
      %v232 = vsel %vm231, %v227, 0.0
      %v233 = vsel %vm231, %v229, 0.0
      %v234 = vadd.f32 %v232, %v233
      %235 = vadd.xlane.f32.xlu0 %v234
      %v236 = vpop.xlane.xlu0 %235
      %v237 = vmul.f32 %v236, 0.00390625
      %v238 = vld [vmem:[%s1] sm:$0xf]
      %v239 = vld [vmem:[#allocation2] sm:$0x1]
      %v240 = vld [vmem:[%s3] sm:$0x1]
      %v241 = vld [vmem:[%s4] sm:$0x1]
      %v242 = vmul.f32 %v237, %v238
      %vm243 = vcmask 3072
      %v244 = vsel %vm243, %v242, 0.0
      %v245 = vrot.slane %v244, 4
      %v246 = vadd.f32 %v244, %v245
      %v247 = vrot.slane %v246, 2
      %v248 = vadd.f32 %v246, %v247
      %v249 = vrot.slane %v248, 1
      %v250 = vadd.f32 %v248, %v249
      %v251 = vadd.f32 %v250, %v239
      %v252 = vxor.u32 %v251, 2147483648
      %v253 = vmul.f32 %v252, 1.442695
      %v254 = vpow.pop %v253
      %v255 = vadd.f32 %v254, 1.0
      %v256 = vrcp.pop %v255
      %v257 = vmul.f32 1.0, %v256
      %v258 = vmul.f32 %v251, %v257
      %260 = vset.pattern.permute.xlu0 0
      %261 = vperm.xlu0 %260, %v258
      %v262 = vpop.permute.xlu0 %261
      %v264 = vmul.f32 %v262, %v240
      %v265 = vadd.f32 %v264, 0.0
      %v266 = vadd.f32 %v265, %v241
      %v267 = vxor.u32 %v266, 2147483648
      %v268 = vmul.f32 %v267, 1.442695
      %v269 = vpow.pop %v268
      %v270 = vadd.f32 %v269, 1.0
      %v271 = vrcp.pop %v270
      %v272 = vmul.f32 1.0, %v271
      %v273 = vlaneseq
      %v274 = vshrl.u32 %v273, 7
      %v275 = vsub.s32 0, %v274
      %v276 = vrot.slane %v272, %v275
      %278 = vbcast.lane.b32.xlu0 %v276, 256
      %v279 = vpop.permute.xlu0 %278
      %v282 = vunpack.c.l.s4 839922192
      %v283 = vunpack.c.0.s8 %v282
      %v284 = vlaneseq
      %v285 = vshrl.u32 %v284, 7
      %v286 = vsub.s32 %v283, %v285
      %v287 = vrot.slane %v279, %v286
      %v289 = vmul.f32 %v227, %v287
      %290 = vst [vmem:[%s226] sm:$0xff] %v289
      %p291 = scmp.lt.s32.totalorder %s18, 1
      %s292 = scalar_select %p291, %s18, 1
      %s293 = smul.addr %s292, 2
      %s294 = smul.addr %s293, 4
      %s295 = scalar_lea.vmem %s5, %s294
      // Predicated region
      $region41: #{squeeze_excite.1} parent=39 // pred_check
        %p296 = pneg %p146
      $region42: #{squeeze_excite.1} parent=39 // pred_check_branch
        %298 = sbr.rel (%p296) target = $region44
      $region43: #{squeeze_excite.1} parent=39 // pred_region
        _
      $region44: #{squeeze_excite.1} parent=39 // pred_fallthru
        _
    $region40: #{squeeze_excite.1} parent=5 // pred_fallthru
      _
    %p299 = scmp.le.s32.totalorder 2, %s13
    // Predicated region
    $region45: #{squeeze_excite.1} parent=5 // pred_check
      %p300 = pneg %p299
    $region46: #{squeeze_excite.1} parent=5 // pred_check_branch
      %302 = sbr.rel (%p300) target = $region48
    $region47: #{squeeze_excite.1} parent=5 // pred_region
      %s303 = ssub.s32 %s13, 2
      // Predicated region
      $region49: #{squeeze_excite.1} parent=47 // pred_check
        %p304 = pneg %p152
      $region50: #{squeeze_excite.1} parent=47 // pred_check_branch
        %306 = sbr.rel (%p304) target = $region52
      $region51: #{squeeze_excite.1} parent=47 // pred_region
        %p307 = scmp.lt.s32.totalorder %s19, 1
        %s308 = scalar_select %p307, %s19, 1
        %s309 = smul.addr %s308, 2
        %s310 = smul.addr %s309, 4
        %s311 = scalar_lea.vmem %s5, %s310
      $region52: #{squeeze_excite.1} parent=47 // pred_fallthru
        _
    $region48: #{squeeze_excite.1} parent=5 // pred_fallthru
      _
  $region6: #{squeeze_excite.1} parent=0 // loop_footer
    %s17 = sadd.s32 1, %s13
  $region7: #{squeeze_excite.1} parent=0 // loop_footer_branch
    %12 = sbr.rel target = $region3
  $region8: #{squeeze_excite.1} parent=0 // loop_exit
    _

</llo_original>
